<compile_context>
chip_gen: v7x
topology: tpu7x:2x2x1
jax: 0.10.0
libtpu: 0.0.40
codegen_flags: <defaults>
</compile_context>

<pallas_src>
import jax
import jax.numpy as jnp
from jax.experimental import pallas as pl
from jax.experimental.pallas import tpu as pltpu

SELU_ALPHA = 1.6732632423543772848170429916717
SELU_SCALE = 1.0507009873554804934193349852946
OUT_PAD = 128  # lane-dense padded output width (true output channels = 3)


def _selu(x):
    # nn.SELU; exp argument clamped to <= 0 so the unselected branch is finite.
    return SELU_SCALE * jnp.where(
        x > 0, x, SELU_ALPHA * (jnp.exp(jnp.minimum(x, 0.0)) - 1.0))


# ----------------------------------------------------------------------------
# Fused kernel: encode (Linear + SELU, max-pool, Linear + SELU) + decode
# (two folding Linear+SELU layers), one batch element per grid step.
# ----------------------------------------------------------------------------
def mlpnet_kernel(x_ref, grid_ref,
                  w1_ref, b1_ref, w2_ref, b2_ref,
                  wd1x_ref, wd1g_ref, bd1_ref,
                  wd2x_ref, wd2k_ref, bd2_ref,
                  out_ref):
    x = x_ref[0]           # (N, 3)  raw points for this batch element
    g = grid_ref[...]      # (N, 2)  folding grid points

    # encode: e_layers1 = Linear(3, h1) + SELU
    y = _selu(jnp.dot(x, w1_ref[...], preferred_element_type=jnp.float32)
              + b1_ref[...])                                    # (N, h1)

    # AdaptiveMaxPool1d(1) over the point axis
    pooled = jnp.max(y, axis=0, keepdims=True)                  # (1, h1)

    # e_layers2 = Linear(h3, h1) + SELU  (h3 == h1, see wrapper assert)
    code = _selu(jnp.dot(pooled, w2_ref[...],
                         preferred_element_type=jnp.float32) + b2_ref[...])

    # decode, d_layers1: cat([code.repeat(N,1), grid]) @ Wd1 + bd1, SELU.
    # All repeated code rows are identical -> contract the code once (1,h1)
    # and broadcast the 1x3 result instead of an (N,h1) matmul.
    code_d1 = jnp.dot(code, wd1x_ref[...], preferred_element_type=jnp.float32)
    k = _selu(jnp.dot(g, wd1g_ref[...], preferred_element_type=jnp.float32)
              + code_d1 + bd1_ref[...])                         # (N, 3)

    # d_layers2: cat([code.repeat(N,1), k]) @ Wd2 + bd2, SELU.
    # Wd2 / bd2 are zero-padded to OUT_PAD lanes -> unmasked lane-dense store.
    code_d2 = jnp.dot(code, wd2x_ref[...], preferred_element_type=jnp.float32)
    out_ref[0] = _selu(
        jnp.dot(k, wd2k_ref[...], preferred_element_type=jnp.float32)
        + code_d2 + bd2_ref[...])                               # (N, OUT_PAD)


# ----------------------------------------------------------------------------
# Glue: grid points, parameter init, wrapper, pure-JAX reference
# ----------------------------------------------------------------------------
def make_grid_points(num_nodes):
    # Mirrors decode(): cartesian_prod(linspace(1,120,nx), linspace(1,60,ny)).
    nx = int(1 + (num_nodes * 120 / 60) ** 0.5)
    ny = int(1 + (num_nodes * 60 / 120) ** 0.5)
    assert nx * ny >= num_nodes
    xg = jnp.linspace(1.0, 120.0, nx, dtype=jnp.float32)
    yg = jnp.linspace(1.0, 60.0, ny, dtype=jnp.float32)
    gp = jnp.stack(jnp.meshgrid(xg, yg, indexing="ij"), axis=-1).reshape(-1, 2)
    return gp[:num_nodes]                                       # (num_nodes, 2)


def _linear_params(key, fan_in, fan_out):
    kw, kb = jax.random.split(key)
    bound = 1.0 / (fan_in ** 0.5)
    W = jax.random.uniform(kw, (fan_in, fan_out), jnp.float32, -bound, bound)
    b = jax.random.uniform(kb, (1, fan_out), jnp.float32, -bound, bound)
    return W, b


def init_params(key, h1, h3):
    # Default initial_state: one Linear per MLP list.
    # e_layers2[0] = Linear(h3, h1) is applied to the h1-wide pooled feature,
    # so the reference only type-checks when h3 == h1.
    assert h1 == h3, "spec feeds h1-wide pooled features into Linear(h3, h1)"
    ks = jax.random.split(key, 4)
    p = {}
    p["w1"], p["b1"] = _linear_params(ks[0], 3, h1)             # e_layers1[0]
    p["w2"], p["b2"] = _linear_params(ks[1], h3, h1)            # e_layers2[0]
    Wd1, bd1 = _linear_params(ks[2], h1 + 2, 3)                 # d_layers1[0]
    p["wd1_x"], p["wd1_g"], p["bd1"] = Wd1[:h1], Wd1[h1:], bd1
    Wd2, bd2 = _linear_params(ks[3], h1 + 3, 3)                 # d_layers2[0]
    # zero-pad the final output channels 3 -> OUT_PAD for a lane-dense store
    p["wd2_x"] = jnp.zeros((h1, OUT_PAD), jnp.float32).at[:, :3].set(Wd2[:h1])
    p["wd2_k"] = jnp.zeros((3, OUT_PAD), jnp.float32).at[:, :3].set(Wd2[h1:])
    p["bd2"] = jnp.zeros((1, OUT_PAD), jnp.float32).at[:, :3].set(bd2)
    return p


def arw_mlpnet_forward(params, x):
    # TODO(synk): the reference forward() calls self.decode(x) without
    # num_nodes (a bug in the spec); we use num_nodes = N (points per cloud).
    B, N, _ = x.shape
    h1 = params["w1"].shape[1]
    grid_pts = make_grid_points(N)

    flops = B * (2 * N * 3 * h1 + 2 * h1 * h1 + 2 * h1 * 3 + 2 * N * 2 * 3
                 + 2 * h1 * OUT_PAD + 2 * N * 3 * OUT_PAD)
    transcendentals = B * (N * h1 + h1 + N * 3 + N * OUT_PAD)
    bytes_accessed = 4 * (B * N * 3 + N * 2 + 3 * h1 + h1 + h1 * h1 + h1
                          + h1 * 3 + 2 * 3 + 3 + h1 * OUT_PAD + 3 * OUT_PAD
                          + OUT_PAD + B * N * OUT_PAD)
    ce = pl.CostEstimate(flops=flops, transcendentals=transcendentals,
                         bytes_accessed=bytes_accessed)

    out_pad = pl.pallas_call(
        mlpnet_kernel,
        out_shape=jax.ShapeDtypeStruct((B, N, OUT_PAD), jnp.float32),
        grid=(B,),
        in_specs=[
            pl.BlockSpec((1, N, 3), lambda b: (b, 0, 0)),       # points
            pl.BlockSpec((N, 2), lambda b: (0, 0)),             # folding grid
            pl.BlockSpec((3, h1), lambda b: (0, 0)),            # e_layers1 W
            pl.BlockSpec((1, h1), lambda b: (0, 0)),            # e_layers1 b
            pl.BlockSpec((h1, h1), lambda b: (0, 0)),           # e_layers2 W
            pl.BlockSpec((1, h1), lambda b: (0, 0)),            # e_layers2 b
            pl.BlockSpec((h1, 3), lambda b: (0, 0)),            # d1 W (code)
            pl.BlockSpec((2, 3), lambda b: (0, 0)),             # d1 W (grid)
            pl.BlockSpec((1, 3), lambda b: (0, 0)),             # d1 b
            pl.BlockSpec((h1, OUT_PAD), lambda b: (0, 0)),      # d2 W (code)
            pl.BlockSpec((3, OUT_PAD), lambda b: (0, 0)),       # d2 W (k)
            pl.BlockSpec((1, OUT_PAD), lambda b: (0, 0)),       # d2 b
        ],
        out_specs=pl.BlockSpec((1, N, OUT_PAD), lambda b: (b, 0, 0)),
        compiler_params=pltpu.CompilerParams(
            dimension_semantics=("parallel",)),
        cost_estimate=ce,
    )(x, grid_pts, params["w1"], params["b1"], params["w2"], params["b2"],
      params["wd1_x"], params["wd1_g"], params["bd1"],
      params["wd2_x"], params["wd2_k"], params["bd2"])
    return out_pad[..., :3]


def reference_forward(params, x):
    """Pure-JAX reference matching the PyTorch forward (for verification)."""
    B, N, _ = x.shape
    P = jax.lax.Precision.HIGHEST
    grid_pts = make_grid_points(N)
    y = _selu(jnp.matmul(x, params["w1"], precision=P) + params["b1"])
    pooled = jnp.max(y, axis=1, keepdims=True)                  # (B,1,h1)
    code = _selu(jnp.matmul(pooled, params["w2"], precision=P) + params["b2"])
    xr = jnp.broadcast_to(code, (B, N, code.shape[-1]))
    g = jnp.broadcast_to(grid_pts[None], (B, N, 2))
    wd1 = jnp.concatenate([params["wd1_x"], params["wd1_g"]], axis=0)
    k = _selu(jnp.matmul(jnp.concatenate([xr, g], -1), wd1, precision=P)
              + params["bd1"])
    wd2 = jnp.concatenate([params["wd2_x"][:, :3], params["wd2_k"][:, :3]], 0)
    out = _selu(jnp.matmul(jnp.concatenate([xr, k], -1), wd2, precision=P)
                + params["bd2"][:, :3])
    return out


if __name__ == "__main__":
    B, N = 2, 16        # batch, points per cloud
    h1 = h3 = 32        # hidden widths (h3 must equal h1, see init_params)

    key = jax.random.PRNGKey(0)
    kx, kp = jax.random.split(key)
    input_data = jax.random.normal(kx, (B, N, 3), dtype=jnp.float32)
    params = init_params(kp, h1, h3)

    out = jax.block_until_ready(arw_mlpnet_forward(params, input_data))
    assert out.shape == (B, N, 3) and out.dtype == jnp.float32
    assert bool(jnp.all(jnp.isfinite(out)))

    ref = reference_forward(params, input_data)
    assert bool(jnp.allclose(out, ref, atol=2e-2, rtol=2e-2)), \
        float(jnp.max(jnp.abs(out - ref)))
    print("KERNEL_OK")
</pallas_src>

<mosaic_0001>
module attributes {stable_mosaic.version = 11 : i64} {
  func.func @mlpnet_kernel(%arg0: i32, %arg1: memref<1x16x3xf32, #tpu.memory_space<vmem>>, %arg2: memref<16x2xf32, #tpu.memory_space<vmem>>, %arg3: memref<3x32xf32, #tpu.memory_space<vmem>>, %arg4: memref<1x32xf32, #tpu.memory_space<vmem>>, %arg5: memref<32x32xf32, #tpu.memory_space<vmem>>, %arg6: memref<1x32xf32, #tpu.memory_space<vmem>>, %arg7: memref<32x3xf32, #tpu.memory_space<vmem>>, %arg8: memref<2x3xf32, #tpu.memory_space<vmem>>, %arg9: memref<1x3xf32, #tpu.memory_space<vmem>>, %arg10: memref<32x128xf32, #tpu.memory_space<vmem>>, %arg11: memref<3x128xf32, #tpu.memory_space<vmem>>, %arg12: memref<1x128xf32, #tpu.memory_space<vmem>>, %arg13: memref<1x16x128xf32, #tpu.memory_space<vmem>>) attributes {dimension_semantics = [#tpu.dimension_semantics<parallel>], iteration_bounds = array<i64: 2>, scalar_prefetch = 0 : i64, scratch_operands = 0 : i64, tpu.core_type = #tpu.core_type<tc>, window_params = [{transform_indices = @transform_0, window_bounds = array<i64: 1, 16, 3>}, {pipeline_mode = #tpu.pipeline_mode<synchronous>, transform_indices = @transform_1, window_bounds = array<i64: 16, 2>}, {pipeline_mode = #tpu.pipeline_mode<synchronous>, transform_indices = @transform_2, window_bounds = array<i64: 3, 32>}, {pipeline_mode = #tpu.pipeline_mode<synchronous>, transform_indices = @transform_3, window_bounds = array<i64: 1, 32>}, {pipeline_mode = #tpu.pipeline_mode<synchronous>, transform_indices = @transform_4, window_bounds = array<i64: 32, 32>}, {pipeline_mode = #tpu.pipeline_mode<synchronous>, transform_indices = @transform_5, window_bounds = array<i64: 1, 32>}, {pipeline_mode = #tpu.pipeline_mode<synchronous>, transform_indices = @transform_6, window_bounds = array<i64: 32, 3>}, {pipeline_mode = #tpu.pipeline_mode<synchronous>, transform_indices = @transform_7, window_bounds = array<i64: 2, 3>}, {pipeline_mode = #tpu.pipeline_mode<synchronous>, transform_indices = @transform_8, window_bounds = array<i64: 1, 3>}, {pipeline_mode = #tpu.pipeline_mode<synchronous>, transform_indices = @transform_9, window_bounds = array<i64: 32, 128>}, {pipeline_mode = #tpu.pipeline_mode<synchronous>, transform_indices = @transform_10, window_bounds = array<i64: 3, 128>}, {pipeline_mode = #tpu.pipeline_mode<synchronous>, transform_indices = @transform_11, window_bounds = array<i64: 1, 128>}, {transform_indices = @transform_12, window_bounds = array<i64: 1, 16, 128>}]} {
    %c0 = arith.constant 0 : index
    %c0_0 = arith.constant 0 : index
    %c0_1 = arith.constant 0 : index
    %0 = vector.load %arg1[%c0, %c0_0, %c0_1] : memref<1x16x3xf32, #tpu.memory_space<vmem>>, vector<1x16x3xf32>
    %1 = vector.shape_cast %0 : vector<1x16x3xf32> to vector<16x3xf32>
    %c0_2 = arith.constant 0 : index
    %c0_3 = arith.constant 0 : index
    %2 = vector.load %arg2[%c0_2, %c0_3] : memref<16x2xf32, #tpu.memory_space<vmem>>, vector<16x2xf32>
    %c0_4 = arith.constant 0 : index
    %c0_5 = arith.constant 0 : index
    %3 = vector.load %arg3[%c0_4, %c0_5] : memref<3x32xf32, #tpu.memory_space<vmem>>, vector<3x32xf32>
    %cst = arith.constant dense<0.000000e+00> : vector<16x32xf32>
    %4 = tpu.matmul %1, %3, %cst {dimension_numbers = #tpu.dot_dimension_numbers<[1], [0], [0], [1], [0, 0, 1, 1], [], []>} : vector<16x3xf32>, vector<3x32xf32>, vector<16x32xf32> -> vector<16x32xf32>
    %c0_6 = arith.constant 0 : index
    %c0_7 = arith.constant 0 : index
    %5 = vector.load %arg4[%c0_6, %c0_7] : memref<1x32xf32, #tpu.memory_space<vmem>>, vector<1x32xf32>
    %6 = vector.broadcast %5 : vector<1x32xf32> to vector<16x32xf32>
    %7 = arith.addf %4, %6 : vector<16x32xf32>
    %cst_8 = arith.constant 0.000000e+00 : f32
    %8 = vector.broadcast %cst_8 : f32 to vector<16x32xf32>
    %9 = arith.cmpf ogt, %7, %8 : vector<16x32xf32>
    %cst_9 = arith.constant 0.000000e+00 : f32
    %10 = vector.broadcast %cst_9 : f32 to vector<16x32xf32>
    %11 = arith.minimumf %7, %10 : vector<16x32xf32>
    %12 = math.exp %11 : vector<16x32xf32>
    %cst_10 = arith.constant 1.000000e+00 : f32
    %13 = vector.broadcast %cst_10 : f32 to vector<16x32xf32>
    %14 = arith.subf %12, %13 : vector<16x32xf32>
    %cst_11 = arith.constant 1.67326319 : f32
    %15 = vector.broadcast %cst_11 : f32 to vector<16x32xf32>
    %16 = arith.mulf %15, %14 : vector<16x32xf32>
    %17 = arith.select %9, %7, %16 : vector<16x32xi1>, vector<16x32xf32>
    %cst_12 = arith.constant 1.05070102 : f32
    %18 = vector.broadcast %cst_12 : f32 to vector<16x32xf32>
    %19 = arith.mulf %18, %17 : vector<16x32xf32>
    %cst_13 = arith.constant dense<0xFF800000> : vector<32xf32>
    %20 = vector.multi_reduction <maximumf>, %19, %cst_13 [0] : vector<16x32xf32> to vector<32xf32>
    %21 = vector.shape_cast %20 : vector<32xf32> to vector<1x32xf32>
    %c0_14 = arith.constant 0 : index
    %c0_15 = arith.constant 0 : index
    %22 = vector.load %arg5[%c0_14, %c0_15] : memref<32x32xf32, #tpu.memory_space<vmem>>, vector<32x32xf32>
    %cst_16 = arith.constant dense<0.000000e+00> : vector<1x32xf32>
    %23 = tpu.matmul %21, %22, %cst_16 {dimension_numbers = #tpu.dot_dimension_numbers<[1], [0], [0], [1], [0, 0, 1, 1], [], []>} : vector<1x32xf32>, vector<32x32xf32>, vector<1x32xf32> -> vector<1x32xf32>
    %c0_17 = arith.constant 0 : index
    %c0_18 = arith.constant 0 : index
    %24 = vector.load %arg6[%c0_17, %c0_18] : memref<1x32xf32, #tpu.memory_space<vmem>>, vector<1x32xf32>
    %25 = arith.addf %23, %24 : vector<1x32xf32>
    %cst_19 = arith.constant 0.000000e+00 : f32
    %26 = vector.broadcast %cst_19 : f32 to vector<1x32xf32>
    %27 = arith.cmpf ogt, %25, %26 : vector<1x32xf32>
    %cst_20 = arith.constant 0.000000e+00 : f32
    %28 = vector.broadcast %cst_20 : f32 to vector<1x32xf32>
    %29 = arith.minimumf %25, %28 : vector<1x32xf32>
    %30 = math.exp %29 : vector<1x32xf32>
    %cst_21 = arith.constant 1.000000e+00 : f32
    %31 = vector.broadcast %cst_21 : f32 to vector<1x32xf32>
    %32 = arith.subf %30, %31 : vector<1x32xf32>
    %cst_22 = arith.constant 1.67326319 : f32
    %33 = vector.broadcast %cst_22 : f32 to vector<1x32xf32>
    %34 = arith.mulf %33, %32 : vector<1x32xf32>
    %35 = arith.select %27, %25, %34 : vector<1x32xi1>, vector<1x32xf32>
    %cst_23 = arith.constant 1.05070102 : f32
    %36 = vector.broadcast %cst_23 : f32 to vector<1x32xf32>
    %37 = arith.mulf %36, %35 : vector<1x32xf32>
    %c0_24 = arith.constant 0 : index
    %c0_25 = arith.constant 0 : index
    %38 = vector.load %arg7[%c0_24, %c0_25] : memref<32x3xf32, #tpu.memory_space<vmem>>, vector<32x3xf32>
    %cst_26 = arith.constant dense<0.000000e+00> : vector<1x3xf32>
    %39 = tpu.matmul %37, %38, %cst_26 {dimension_numbers = #tpu.dot_dimension_numbers<[1], [0], [0], [1], [0, 0, 1, 1], [], []>} : vector<1x32xf32>, vector<32x3xf32>, vector<1x3xf32> -> vector<1x3xf32>
    %c0_27 = arith.constant 0 : index
    %c0_28 = arith.constant 0 : index
    %40 = vector.load %arg8[%c0_27, %c0_28] : memref<2x3xf32, #tpu.memory_space<vmem>>, vector<2x3xf32>
    %cst_29 = arith.constant dense<0.000000e+00> : vector<16x3xf32>
    %41 = tpu.matmul %2, %40, %cst_29 {dimension_numbers = #tpu.dot_dimension_numbers<[1], [0], [0], [1], [0, 0, 1, 1], [], []>} : vector<16x2xf32>, vector<2x3xf32>, vector<16x3xf32> -> vector<16x3xf32>
    %42 = vector.broadcast %39 : vector<1x3xf32> to vector<16x3xf32>
    %43 = arith.addf %41, %42 : vector<16x3xf32>
    %c0_30 = arith.constant 0 : index
    %c0_31 = arith.constant 0 : index
    %44 = vector.load %arg9[%c0_30, %c0_31] : memref<1x3xf32, #tpu.memory_space<vmem>>, vector<1x3xf32>
    %45 = vector.broadcast %44 : vector<1x3xf32> to vector<16x3xf32>
    %46 = arith.addf %43, %45 : vector<16x3xf32>
    %cst_32 = arith.constant 0.000000e+00 : f32
    %47 = vector.broadcast %cst_32 : f32 to vector<16x3xf32>
    %48 = arith.cmpf ogt, %46, %47 : vector<16x3xf32>
    %cst_33 = arith.constant 0.000000e+00 : f32
    %49 = vector.broadcast %cst_33 : f32 to vector<16x3xf32>
    %50 = arith.minimumf %46, %49 : vector<16x3xf32>
    %51 = math.exp %50 : vector<16x3xf32>
    %cst_34 = arith.constant 1.000000e+00 : f32
    %52 = vector.broadcast %cst_34 : f32 to vector<16x3xf32>
    %53 = arith.subf %51, %52 : vector<16x3xf32>
    %cst_35 = arith.constant 1.67326319 : f32
    %54 = vector.broadcast %cst_35 : f32 to vector<16x3xf32>
    %55 = arith.mulf %54, %53 : vector<16x3xf32>
    %56 = arith.select %48, %46, %55 : vector<16x3xi1>, vector<16x3xf32>
    %cst_36 = arith.constant 1.05070102 : f32
    %57 = vector.broadcast %cst_36 : f32 to vector<16x3xf32>
    %58 = arith.mulf %57, %56 : vector<16x3xf32>
    %c0_37 = arith.constant 0 : index
    %c0_38 = arith.constant 0 : index
    %59 = vector.load %arg10[%c0_37, %c0_38] : memref<32x128xf32, #tpu.memory_space<vmem>>, vector<32x128xf32>
    %cst_39 = arith.constant dense<0.000000e+00> : vector<1x128xf32>
    %60 = tpu.matmul %37, %59, %cst_39 {dimension_numbers = #tpu.dot_dimension_numbers<[1], [0], [0], [1], [0, 0, 1, 1], [], []>} : vector<1x32xf32>, vector<32x128xf32>, vector<1x128xf32> -> vector<1x128xf32>
    %c0_40 = arith.constant 0 : index
    %c0_41 = arith.constant 0 : index
    %61 = vector.load %arg11[%c0_40, %c0_41] : memref<3x128xf32, #tpu.memory_space<vmem>>, vector<3x128xf32>
    %cst_42 = arith.constant dense<0.000000e+00> : vector<16x128xf32>
    %62 = tpu.matmul %58, %61, %cst_42 {dimension_numbers = #tpu.dot_dimension_numbers<[1], [0], [0], [1], [0, 0, 1, 1], [], []>} : vector<16x3xf32>, vector<3x128xf32>, vector<16x128xf32> -> vector<16x128xf32>
    %63 = vector.broadcast %60 : vector<1x128xf32> to vector<16x128xf32>
    %64 = arith.addf %62, %63 : vector<16x128xf32>
    %c0_43 = arith.constant 0 : index
    %c0_44 = arith.constant 0 : index
    %65 = vector.load %arg12[%c0_43, %c0_44] : memref<1x128xf32, #tpu.memory_space<vmem>>, vector<1x128xf32>
    %66 = vector.broadcast %65 : vector<1x128xf32> to vector<16x128xf32>
    %67 = arith.addf %64, %66 : vector<16x128xf32>
    %cst_45 = arith.constant 0.000000e+00 : f32
    %68 = vector.broadcast %cst_45 : f32 to vector<16x128xf32>
    %69 = arith.cmpf ogt, %67, %68 : vector<16x128xf32>
    %cst_46 = arith.constant 0.000000e+00 : f32
    %70 = vector.broadcast %cst_46 : f32 to vector<16x128xf32>
    %71 = arith.minimumf %67, %70 : vector<16x128xf32>
    %72 = math.exp %71 : vector<16x128xf32>
    %cst_47 = arith.constant 1.000000e+00 : f32
    %73 = vector.broadcast %cst_47 : f32 to vector<16x128xf32>
    %74 = arith.subf %72, %73 : vector<16x128xf32>
    %cst_48 = arith.constant 1.67326319 : f32
    %75 = vector.broadcast %cst_48 : f32 to vector<16x128xf32>
    %76 = arith.mulf %75, %74 : vector<16x128xf32>
    %77 = arith.select %69, %67, %76 : vector<16x128xi1>, vector<16x128xf32>
    %cst_49 = arith.constant 1.05070102 : f32
    %78 = vector.broadcast %cst_49 : f32 to vector<16x128xf32>
    %79 = arith.mulf %78, %77 : vector<16x128xf32>
    %c0_50 = arith.constant 0 : index
    %c0_51 = arith.constant 0 : index
    %c0_52 = arith.constant 0 : index
    %80 = vector.load %arg13[%c0_50, %c0_51, %c0_52] : memref<1x16x128xf32, #tpu.memory_space<vmem>>, vector<1x16x128xf32>
    %81 = vector.shape_cast %80 : vector<1x16x128xf32> to vector<16x128xf32>
    %82 = vector.shape_cast %79 : vector<16x128xf32> to vector<1x16x128xf32>
    tpu.vector_store %arg13[%c0_50, %c0_51, %c0_52], %82 {strides = array<i32>} : memref<1x16x128xf32, #tpu.memory_space<vmem>>, vector<1x16x128xf32>,
    return
  }
  func.func @transform_0(%arg0: i32) -> (i32, i32, i32) {
    %c0_i32 = arith.constant 0 : i32
    %c0_i32_0 = arith.constant 0 : i32
    %c0_i32_1 = arith.constant 0 : i32
    return %arg0, %c0_i32, %c0_i32_0 : i32, i32, i32
  }
  func.func @transform_1(%arg0: i32) -> (i32, i32) {
    %c0_i32 = arith.constant 0 : i32
    %c0_i32_0 = arith.constant 0 : i32
    %c0_i32_1 = arith.constant 0 : i32
    return %c0_i32, %c0_i32_0 : i32, i32
  }
  func.func @transform_2(%arg0: i32) -> (i32, i32) {
    %c0_i32 = arith.constant 0 : i32
    %c0_i32_0 = arith.constant 0 : i32
    %c0_i32_1 = arith.constant 0 : i32
    return %c0_i32, %c0_i32_0 : i32, i32
  }
  func.func @transform_3(%arg0: i32) -> (i32, i32) {
    %c0_i32 = arith.constant 0 : i32
    %c0_i32_0 = arith.constant 0 : i32
    %c0_i32_1 = arith.constant 0 : i32
    return %c0_i32, %c0_i32_0 : i32, i32
  }
  func.func @transform_4(%arg0: i32) -> (i32, i32) {
    %c0_i32 = arith.constant 0 : i32
    %c0_i32_0 = arith.constant 0 : i32
    %c0_i32_1 = arith.constant 0 : i32
    return %c0_i32, %c0_i32_0 : i32, i32
  }
  func.func @transform_5(%arg0: i32) -> (i32, i32) {
    %c0_i32 = arith.constant 0 : i32
    %c0_i32_0 = arith.constant 0 : i32
    %c0_i32_1 = arith.constant 0 : i32
    return %c0_i32, %c0_i32_0 : i32, i32
  }
  func.func @transform_6(%arg0: i32) -> (i32, i32) {
    %c0_i32 = arith.constant 0 : i32
    %c0_i32_0 = arith.constant 0 : i32
    %c0_i32_1 = arith.constant 0 : i32
    return %c0_i32, %c0_i32_0 : i32, i32
  }
  func.func @transform_7(%arg0: i32) -> (i32, i32) {
    %c0_i32 = arith.constant 0 : i32
    %c0_i32_0 = arith.constant 0 : i32
    %c0_i32_1 = arith.constant 0 : i32
    return %c0_i32, %c0_i32_0 : i32, i32
  }
  func.func @transform_8(%arg0: i32) -> (i32, i32) {
    %c0_i32 = arith.constant 0 : i32
    %c0_i32_0 = arith.constant 0 : i32
    %c0_i32_1 = arith.constant 0 : i32
    return %c0_i32, %c0_i32_0 : i32, i32
  }
  func.func @transform_9(%arg0: i32) -> (i32, i32) {
    %c0_i32 = arith.constant 0 : i32
    %c0_i32_0 = arith.constant 0 : i32
    %c0_i32_1 = arith.constant 0 : i32
    return %c0_i32, %c0_i32_0 : i32, i32
  }
  func.func @transform_10(%arg0: i32) -> (i32, i32) {
    %c0_i32 = arith.constant 0 : i32
    %c0_i32_0 = arith.constant 0 : i32
    %c0_i32_1 = arith.constant 0 : i32
    return %c0_i32, %c0_i32_0 : i32, i32
  }
  func.func @transform_11(%arg0: i32) -> (i32, i32) {
    %c0_i32 = arith.constant 0 : i32
    %c0_i32_0 = arith.constant 0 : i32
    %c0_i32_1 = arith.constant 0 : i32
    return %c0_i32, %c0_i32_0 : i32, i32
  }
  func.func @transform_12(%arg0: i32) -> (i32, i32, i32) {
    %c0_i32 = arith.constant 0 : i32
    %c0_i32_0 = arith.constant 0 : i32
    %c0_i32_1 = arith.constant 0 : i32
    return %arg0, %c0_i32, %c0_i32_0 : i32, i32, i32
  }
}

</mosaic_0001>

<llo_original>
// kernel: tpu_custom_call.1
$region0: #{tpu_custom_call.1}
  #allocation0 [shape = 'u32[]', space=smem, size = 0x4, offset = 0x4, fixed_abs, tag = 'smem constant byte address 0x4 - core index']
  #allocation1 [shape = 'u32[144,128]{1,0:T(1,128)}', space=vmem, size = 0x12000, scoped, tag = 'internal scratch']
  %s0 = inlined_call_operand.vmem [shape: f32[2,16,3], index: 0, kind: input, shape index: {}]
  %s1 = inlined_call_operand.vmem [shape: f32[16,2], index: 1, kind: input, shape index: {}]
  %s2 = inlined_call_operand.vmem [shape: f32[3,32], index: 2, kind: input, shape index: {}]
  %s3 = inlined_call_operand.vmem [shape: f32[1,32], index: 3, kind: input, shape index: {}]
  %s4 = inlined_call_operand.vmem [shape: f32[32,32], index: 4, kind: input, shape index: {}]
  %s5 = inlined_call_operand.vmem [shape: f32[1,32], index: 5, kind: input, shape index: {}]
  %s6 = inlined_call_operand.vmem [shape: f32[32,3], index: 6, kind: input, shape index: {}]
  %s7 = inlined_call_operand.vmem [shape: f32[2,3], index: 7, kind: input, shape index: {}]
  %s8 = inlined_call_operand.vmem [shape: f32[1,3], index: 8, kind: input, shape index: {}]
  %s9 = inlined_call_operand.vmem [shape: f32[32,128], index: 9, kind: input, shape index: {}]
  %s10 = inlined_call_operand.vmem [shape: f32[3,128], index: 10, kind: input, shape index: {}]
  %s11 = inlined_call_operand.vmem [shape: f32[1,128], index: 11, kind: input, shape index: {}]
  %s12 = inlined_call_operand.hbm [shape: f32[2,16,128], index: 12, kind: output, shape index: {}]
  %s13 = sld [smem:[#allocation0]]
  $region81: #{tpu_custom_call.1} parent=0
    _
  %s15 = ssub.s32 1, %s13
  %s16 = scalar_select 0, %s15, %s13
  $region1: #{tpu_custom_call.1} parent=0
    #allocation2 [shape = 'u8[16384]{0}', space=vmem, size = 0x4000, scoped, tag = 'output window, operand 0']
    #allocation3 [shape = 's32[2]{0}', space=sflag, size = 0x8, scoped, tag = 'scoped memory for tpu_custom_call.1']
    %17 = vsyncpa [#allocation3], 0
    %s18 = scalar_lea.sflag [#allocation3], 1
    %19 = vsyncpa %s18, 0
    loop: start=0, step=1, limit=4
    $region2: #{tpu_custom_call.1} parent=1 // loop_pre_header
      _
    $region3: #{tpu_custom_call.1} parent=1 // loop_header
      %s21 = sphi 0, %s25
      %p22 = scmp.ge.s32.totalorder %s21, 4
      %s31 = sphi 0, %s33
      %s34 = sphi 0, %s31
      %s35 = sphi 0, %s34
      %s51 = sphi 0, %s35
      %s55 = sphi 0, %s55
      %s57 = sphi 0, %s55
      %s58 = sphi 0, %s57
      %s72 = sphi 0, %s58
      %s76 = sphi 0, %s76
      %s78 = sphi 0, %s76
      %s79 = sphi 0, %s78
      %s93 = sphi 0, %s79
      %s97 = sphi 0, %s97
      %s99 = sphi 0, %s97
      %s100 = sphi 0, %s99
      %s114 = sphi 0, %s100
      %s118 = sphi 0, %s118
      %s120 = sphi 0, %s118
      %s121 = sphi 0, %s120
      %s135 = sphi 0, %s121
      %s139 = sphi 0, %s139
      %s141 = sphi 0, %s139
      %s142 = sphi 0, %s141
      %s156 = sphi 0, %s142
      %s160 = sphi 0, %s160
      %s162 = sphi 0, %s160
      %s163 = sphi 0, %s162
      %s177 = sphi 0, %s163
      %s181 = sphi 0, %s181
      %s183 = sphi 0, %s181
      %s184 = sphi 0, %s183
      %s198 = sphi 0, %s184
      %s202 = sphi 0, %s202
      %s204 = sphi 0, %s202
      %s205 = sphi 0, %s204
      %s219 = sphi 0, %s205
      %s223 = sphi 0, %s223
      %s225 = sphi 0, %s223
      %s226 = sphi 0, %s225
      %s240 = sphi 0, %s226
      %s244 = sphi 0, %s244
      %s246 = sphi 0, %s244
      %s247 = sphi 0, %s246
      %s261 = sphi 0, %s247
      %s265 = sphi 0, %s265
      %s267 = sphi 0, %s265
      %s268 = sphi 0, %s267
      %s282 = sphi 0, %s268
      %s288 = sphi 0, %s290
      %s291 = sphi 0, %s288
      %s292 = sphi 0, %s291
      %s308 = sphi 0, %s292
    $region4: #{tpu_custom_call.1} parent=1 // loop_header_branch
      %24 = sbr.rel (%p22) target = $region8
    $region5: #{tpu_custom_call.1} parent=1 // loop_body
      %s26 = ssub.s32 %s21, 1
      %s27 = ssub.s32 %s21, 2
      %s28 = sadd.s32 %s21, 1
      %s29 = ssub.s32 %s21, %s28
      %p30 = scmp.eq.s32.totalorder %s29, 0
      %s32 = sadd.s32 %s31, 1
      %s33 = scalar_select %p30, %s31, %s32
      %p36 = pneg %p30
      %p37 = scmp.eq.s32.totalorder %s21, 1
      %p38 = por %p36, %p37
      %p39 = scmp.ne.s32.totalorder %s31, %s34
      %p40 = scmp.eq.s32.totalorder %s21, 0
      %p41 = por %p39, %p40
      %p42 = scmp.ne.s32.totalorder %s31, %s34
      %p43 = scmp.eq.s32.totalorder %s26, 1
      %p44 = por %p42, %p43
      %p45 = scmp.ne.s32.totalorder %s34, %s35
      %p46 = scmp.eq.s32.totalorder %s26, 0
      %p47 = por %p45, %p46
      %p48 = scmp.ne.s32.totalorder %s34, %s35
      %p49 = scmp.eq.s32.totalorder %s27, 1
      %p50 = por %p48, %p49
      %p52 = scmp.ne.s32.totalorder %s35, %s51
      %p53 = scmp.eq.s32.totalorder %s27, 0
      %p54 = por %p52, %p53
      %s56 = sadd.s32 %s55, 1
      %p59 = scmp.eq.s32.totalorder %s21, 1
      %p60 = scmp.ne.s32.totalorder %s55, %s57
      %p61 = scmp.eq.s32.totalorder %s21, 0
      %p62 = por %p60, %p61
      %p63 = scmp.ne.s32.totalorder %s55, %s57
      %p64 = scmp.eq.s32.totalorder %s26, 1
      %p65 = por %p63, %p64
      %p66 = scmp.ne.s32.totalorder %s57, %s58
      %p67 = scmp.eq.s32.totalorder %s26, 0
      %p68 = por %p66, %p67
      %p69 = scmp.ne.s32.totalorder %s57, %s58
      %p70 = scmp.eq.s32.totalorder %s27, 1
      %p71 = por %p69, %p70
      %p73 = scmp.ne.s32.totalorder %s58, %s72
      %p74 = scmp.eq.s32.totalorder %s27, 0
      %p75 = por %p73, %p74
      %s77 = sadd.s32 %s76, 1
      %p80 = scmp.eq.s32.totalorder %s21, 1
      %p81 = scmp.ne.s32.totalorder %s76, %s78
      %p82 = scmp.eq.s32.totalorder %s21, 0
      %p83 = por %p81, %p82
      %p84 = scmp.ne.s32.totalorder %s76, %s78
      %p85 = scmp.eq.s32.totalorder %s26, 1
      %p86 = por %p84, %p85
      %p87 = scmp.ne.s32.totalorder %s78, %s79
      %p88 = scmp.eq.s32.totalorder %s26, 0
      %p89 = por %p87, %p88
      %p90 = scmp.ne.s32.totalorder %s78, %s79
      %p91 = scmp.eq.s32.totalorder %s27, 1
      %p92 = por %p90, %p91
      %p94 = scmp.ne.s32.totalorder %s79, %s93
      %p95 = scmp.eq.s32.totalorder %s27, 0
      %p96 = por %p94, %p95
      %s98 = sadd.s32 %s97, 1
      %p101 = scmp.eq.s32.totalorder %s21, 1
      %p102 = scmp.ne.s32.totalorder %s97, %s99
      %p103 = scmp.eq.s32.totalorder %s21, 0
      %p104 = por %p102, %p103
      %p105 = scmp.ne.s32.totalorder %s97, %s99
      %p106 = scmp.eq.s32.totalorder %s26, 1
      %p107 = por %p105, %p106
      %p108 = scmp.ne.s32.totalorder %s99, %s100
      %p109 = scmp.eq.s32.totalorder %s26, 0
      %p110 = por %p108, %p109
      %p111 = scmp.ne.s32.totalorder %s99, %s100
      %p112 = scmp.eq.s32.totalorder %s27, 1
      %p113 = por %p111, %p112
      %p115 = scmp.ne.s32.totalorder %s100, %s114
      %p116 = scmp.eq.s32.totalorder %s27, 0
      %p117 = por %p115, %p116
      %s119 = sadd.s32 %s118, 1
      %p122 = scmp.eq.s32.totalorder %s21, 1
      %p123 = scmp.ne.s32.totalorder %s118, %s120
      %p124 = scmp.eq.s32.totalorder %s21, 0
      %p125 = por %p123, %p124
      %p126 = scmp.ne.s32.totalorder %s118, %s120
      %p127 = scmp.eq.s32.totalorder %s26, 1
      %p128 = por %p126, %p127
      %p129 = scmp.ne.s32.totalorder %s120, %s121
      %p130 = scmp.eq.s32.totalorder %s26, 0
      %p131 = por %p129, %p130
      %p132 = scmp.ne.s32.totalorder %s120, %s121
      %p133 = scmp.eq.s32.totalorder %s27, 1
      %p134 = por %p132, %p133
      %p136 = scmp.ne.s32.totalorder %s121, %s135
      %p137 = scmp.eq.s32.totalorder %s27, 0
      %p138 = por %p136, %p137
      %s140 = sadd.s32 %s139, 1
      %p143 = scmp.eq.s32.totalorder %s21, 1
      %p144 = scmp.ne.s32.totalorder %s139, %s141
      %p145 = scmp.eq.s32.totalorder %s21, 0
      %p146 = por %p144, %p145
      %p147 = scmp.ne.s32.totalorder %s139, %s141
      %p148 = scmp.eq.s32.totalorder %s26, 1
      %p149 = por %p147, %p148
      %p150 = scmp.ne.s32.totalorder %s141, %s142
      %p151 = scmp.eq.s32.totalorder %s26, 0
      %p152 = por %p150, %p151
      %p153 = scmp.ne.s32.totalorder %s141, %s142
      %p154 = scmp.eq.s32.totalorder %s27, 1
      %p155 = por %p153, %p154
      %p157 = scmp.ne.s32.totalorder %s142, %s156
      %p158 = scmp.eq.s32.totalorder %s27, 0
      %p159 = por %p157, %p158
      %s161 = sadd.s32 %s160, 1
      %p164 = scmp.eq.s32.totalorder %s21, 1
      %p165 = scmp.ne.s32.totalorder %s160, %s162
      %p166 = scmp.eq.s32.totalorder %s21, 0
      %p167 = por %p165, %p166
      %p168 = scmp.ne.s32.totalorder %s160, %s162
      %p169 = scmp.eq.s32.totalorder %s26, 1
      %p170 = por %p168, %p169
      %p171 = scmp.ne.s32.totalorder %s162, %s163
      %p172 = scmp.eq.s32.totalorder %s26, 0
      %p173 = por %p171, %p172
      %p174 = scmp.ne.s32.totalorder %s162, %s163
      %p175 = scmp.eq.s32.totalorder %s27, 1
      %p176 = por %p174, %p175
      %p178 = scmp.ne.s32.totalorder %s163, %s177
      %p179 = scmp.eq.s32.totalorder %s27, 0
      %p180 = por %p178, %p179
      %s182 = sadd.s32 %s181, 1
      %p185 = scmp.eq.s32.totalorder %s21, 1
      %p186 = scmp.ne.s32.totalorder %s181, %s183
      %p187 = scmp.eq.s32.totalorder %s21, 0
      %p188 = por %p186, %p187
      %p189 = scmp.ne.s32.totalorder %s181, %s183
      %p190 = scmp.eq.s32.totalorder %s26, 1
      %p191 = por %p189, %p190
      %p192 = scmp.ne.s32.totalorder %s183, %s184
      %p193 = scmp.eq.s32.totalorder %s26, 0
      %p194 = por %p192, %p193
      %p195 = scmp.ne.s32.totalorder %s183, %s184
      %p196 = scmp.eq.s32.totalorder %s27, 1
      %p197 = por %p195, %p196
      %p199 = scmp.ne.s32.totalorder %s184, %s198
      %p200 = scmp.eq.s32.totalorder %s27, 0
      %p201 = por %p199, %p200
      %s203 = sadd.s32 %s202, 1
      %p206 = scmp.eq.s32.totalorder %s21, 1
      %p207 = scmp.ne.s32.totalorder %s202, %s204
      %p208 = scmp.eq.s32.totalorder %s21, 0
      %p209 = por %p207, %p208
      %p210 = scmp.ne.s32.totalorder %s202, %s204
      %p211 = scmp.eq.s32.totalorder %s26, 1
      %p212 = por %p210, %p211
      %p213 = scmp.ne.s32.totalorder %s204, %s205
      %p214 = scmp.eq.s32.totalorder %s26, 0
      %p215 = por %p213, %p214
      %p216 = scmp.ne.s32.totalorder %s204, %s205
      %p217 = scmp.eq.s32.totalorder %s27, 1
      %p218 = por %p216, %p217
      %p220 = scmp.ne.s32.totalorder %s205, %s219
      %p221 = scmp.eq.s32.totalorder %s27, 0
      %p222 = por %p220, %p221
      %s224 = sadd.s32 %s223, 1
      %p227 = scmp.eq.s32.totalorder %s21, 1
      %p228 = scmp.ne.s32.totalorder %s223, %s225
      %p229 = scmp.eq.s32.totalorder %s21, 0
      %p230 = por %p228, %p229
      %p231 = scmp.ne.s32.totalorder %s223, %s225
      %p232 = scmp.eq.s32.totalorder %s26, 1
      %p233 = por %p231, %p232
      %p234 = scmp.ne.s32.totalorder %s225, %s226
      %p235 = scmp.eq.s32.totalorder %s26, 0
      %p236 = por %p234, %p235
      %p237 = scmp.ne.s32.totalorder %s225, %s226
      %p238 = scmp.eq.s32.totalorder %s27, 1
      %p239 = por %p237, %p238
      %p241 = scmp.ne.s32.totalorder %s226, %s240
      %p242 = scmp.eq.s32.totalorder %s27, 0
      %p243 = por %p241, %p242
      %s245 = sadd.s32 %s244, 1
      %p248 = scmp.eq.s32.totalorder %s21, 1
      %p249 = scmp.ne.s32.totalorder %s244, %s246
      %p250 = scmp.eq.s32.totalorder %s21, 0
      %p251 = por %p249, %p250
      %p252 = scmp.ne.s32.totalorder %s244, %s246
      %p253 = scmp.eq.s32.totalorder %s26, 1
      %p254 = por %p252, %p253
      %p255 = scmp.ne.s32.totalorder %s246, %s247
      %p256 = scmp.eq.s32.totalorder %s26, 0
      %p257 = por %p255, %p256
      %p258 = scmp.ne.s32.totalorder %s246, %s247
      %p259 = scmp.eq.s32.totalorder %s27, 1
      %p260 = por %p258, %p259
      %p262 = scmp.ne.s32.totalorder %s247, %s261
      %p263 = scmp.eq.s32.totalorder %s27, 0
      %p264 = por %p262, %p263
      %s266 = sadd.s32 %s265, 1
      %p269 = scmp.eq.s32.totalorder %s21, 1
      %p270 = scmp.ne.s32.totalorder %s265, %s267
      %p271 = scmp.eq.s32.totalorder %s21, 0
      %p272 = por %p270, %p271
      %p273 = scmp.ne.s32.totalorder %s265, %s267
      %p274 = scmp.eq.s32.totalorder %s26, 1
      %p275 = por %p273, %p274
      %p276 = scmp.ne.s32.totalorder %s267, %s268
      %p277 = scmp.eq.s32.totalorder %s26, 0
      %p278 = por %p276, %p277
      %p279 = scmp.ne.s32.totalorder %s267, %s268
      %p280 = scmp.eq.s32.totalorder %s27, 1
      %p281 = por %p279, %p280
      %p283 = scmp.ne.s32.totalorder %s268, %s282
      %p284 = scmp.eq.s32.totalorder %s27, 0
      %p285 = por %p283, %p284
      %s286 = ssub.s32 %s21, %s28
      %p287 = scmp.eq.s32.totalorder %s286, 0
      %s289 = sadd.s32 %s288, 1
      %s290 = scalar_select %p287, %s288, %s289
      %p293 = pneg %p287
      %p294 = scmp.eq.s32.totalorder %s21, 1
      %p295 = por %p293, %p294
      %p296 = scmp.ne.s32.totalorder %s288, %s291
      %p297 = scmp.eq.s32.totalorder %s21, 0
      %p298 = por %p296, %p297
      %p299 = scmp.ne.s32.totalorder %s288, %s291
      %p300 = scmp.eq.s32.totalorder %s26, 1
      %p301 = por %p299, %p300
      %p302 = scmp.ne.s32.totalorder %s291, %s292
      %p303 = scmp.eq.s32.totalorder %s26, 0
      %p304 = por %p302, %p303
      %p305 = scmp.ne.s32.totalorder %s291, %s292
      %p306 = scmp.eq.s32.totalorder %s27, 1
      %p307 = por %p305, %p306
      %p309 = scmp.ne.s32.totalorder %s292, %s308
      %p310 = scmp.eq.s32.totalorder %s27, 0
      %p311 = por %p309, %p310
      %p312 = scmp.le.s32.totalorder 1, %s21
      %p313 = scmp.lt.s32.totalorder %s21, 3
      %p314 = pnand %p312, %p313
      %p315 = pneg %p314
      // Predicated region
      $region9: #{tpu_custom_call.1} parent=5 // pred_check
        _
      $region10: #{tpu_custom_call.1} parent=5 // pred_check_branch
        %317 = sbr.rel (%p314) target = $region12
      $region11: #{tpu_custom_call.1} parent=5 // pred_region
        %s318 = ssub.s32 %s21, 1
        // Predicated region
        $region13: #{tpu_custom_call.1} parent=11 // pred_check
          %p319 = pneg %p68
        $region14: #{tpu_custom_call.1} parent=11 // pred_check_branch
          %321 = sbr.rel (%p319) target = $region16
        $region15: #{tpu_custom_call.1} parent=11 // pred_region
          _
        $region16: #{tpu_custom_call.1} parent=11 // pred_fallthru
          _
        // Predicated region
        $region17: #{tpu_custom_call.1} parent=11 // pred_check
          %p322 = pneg %p89
        $region18: #{tpu_custom_call.1} parent=11 // pred_check_branch
          %324 = sbr.rel (%p322) target = $region20
        $region19: #{tpu_custom_call.1} parent=11 // pred_region
          _
        $region20: #{tpu_custom_call.1} parent=11 // pred_fallthru
          _
        // Predicated region
        $region21: #{tpu_custom_call.1} parent=11 // pred_check
          %p325 = pneg %p110
        $region22: #{tpu_custom_call.1} parent=11 // pred_check_branch
          %327 = sbr.rel (%p325) target = $region24
        $region23: #{tpu_custom_call.1} parent=11 // pred_region
          _
        $region24: #{tpu_custom_call.1} parent=11 // pred_fallthru
          _
        // Predicated region
        $region25: #{tpu_custom_call.1} parent=11 // pred_check
          %p328 = pneg %p131
        $region26: #{tpu_custom_call.1} parent=11 // pred_check_branch
          %330 = sbr.rel (%p328) target = $region28
        $region27: #{tpu_custom_call.1} parent=11 // pred_region
          _
        $region28: #{tpu_custom_call.1} parent=11 // pred_fallthru
          _
        // Predicated region
        $region29: #{tpu_custom_call.1} parent=11 // pred_check
          %p331 = pneg %p152
        $region30: #{tpu_custom_call.1} parent=11 // pred_check_branch
          %333 = sbr.rel (%p331) target = $region32
        $region31: #{tpu_custom_call.1} parent=11 // pred_region
          _
        $region32: #{tpu_custom_call.1} parent=11 // pred_fallthru
          _
        // Predicated region
        $region33: #{tpu_custom_call.1} parent=11 // pred_check
          %p334 = pneg %p173
        $region34: #{tpu_custom_call.1} parent=11 // pred_check_branch
          %336 = sbr.rel (%p334) target = $region36
        $region35: #{tpu_custom_call.1} parent=11 // pred_region
          _
        $region36: #{tpu_custom_call.1} parent=11 // pred_fallthru
          _
        // Predicated region
        $region37: #{tpu_custom_call.1} parent=11 // pred_check
          %p337 = pneg %p194
        $region38: #{tpu_custom_call.1} parent=11 // pred_check_branch
          %339 = sbr.rel (%p337) target = $region40
        $region39: #{tpu_custom_call.1} parent=11 // pred_region
          _
        $region40: #{tpu_custom_call.1} parent=11 // pred_fallthru
          _
        // Predicated region
        $region41: #{tpu_custom_call.1} parent=11 // pred_check
          %p340 = pneg %p215
        $region42: #{tpu_custom_call.1} parent=11 // pred_check_branch
          %342 = sbr.rel (%p340) target = $region44
        $region43: #{tpu_custom_call.1} parent=11 // pred_region
          _
        $region44: #{tpu_custom_call.1} parent=11 // pred_fallthru
          _
        // Predicated region
        $region45: #{tpu_custom_call.1} parent=11 // pred_check
          %p343 = pneg %p236
        $region46: #{tpu_custom_call.1} parent=11 // pred_check_branch
          %345 = sbr.rel (%p343) target = $region48
        $region47: #{tpu_custom_call.1} parent=11 // pred_region
          _
        $region48: #{tpu_custom_call.1} parent=11 // pred_fallthru
          _
        // Predicated region
        $region49: #{tpu_custom_call.1} parent=11 // pred_check
          %p346 = pneg %p257
        $region50: #{tpu_custom_call.1} parent=11 // pred_check_branch
          %348 = sbr.rel (%p346) target = $region52
        $region51: #{tpu_custom_call.1} parent=11 // pred_region
          _
        $region52: #{tpu_custom_call.1} parent=11 // pred_fallthru
          _
        // Predicated region
        $region53: #{tpu_custom_call.1} parent=11 // pred_check
          %p349 = pneg %p278
        $region54: #{tpu_custom_call.1} parent=11 // pred_check_branch
          %351 = sbr.rel (%p349) target = $region56
        $region55: #{tpu_custom_call.1} parent=11 // pred_region
          _
        $region56: #{tpu_custom_call.1} parent=11 // pred_fallthru
          _
      $region12: #{tpu_custom_call.1} parent=5 // pred_fallthru
        _
      %p352 = scmp.lt.s32.totalorder %s21, 2
      // Predicated region
      $region57: #{tpu_custom_call.1} parent=5 // pred_check
        %p353 = pneg %p352
      $region58: #{tpu_custom_call.1} parent=5 // pred_check_branch
        %355 = sbr.rel (%p353) target = $region60
      $region59: #{tpu_custom_call.1} parent=5 // pred_region
        // Predicated region
        $region61: #{tpu_custom_call.1} parent=59 // pred_check
          %p356 = pneg %p41
        $region62: #{tpu_custom_call.1} parent=59 // pred_check_branch
          %358 = sbr.rel (%p356) target = $region64
        $region63: #{tpu_custom_call.1} parent=59 // pred_region
          %p359 = scmp.lt.s32.totalorder %s21, 1
          %s360 = scalar_select %p359, %s21, 1
          %s361 = smul.addr %s360, 2
          %s362 = smul.addr %s361, 8
          %s363 = scalar_lea.vmem %s0, %s362
        $region64: #{tpu_custom_call.1} parent=59 // pred_fallthru
          _
      $region60: #{tpu_custom_call.1} parent=5 // pred_fallthru
        _
      %p364 = scmp.le.s32.totalorder 1, %s21
      %p365 = scmp.lt.s32.totalorder %s21, 3
      %p366 = pnand %p364, %p365
      %p367 = pneg %p366
      // Predicated region
      $region65: #{tpu_custom_call.1} parent=5 // pred_check
        _
      $region66: #{tpu_custom_call.1} parent=5 // pred_check_branch
        %369 = sbr.rel (%p366) target = $region68
      $region67: #{tpu_custom_call.1} parent=5 // pred_region
        %s370 = ssub.s32 %s21, 1
        %p371 = scmp.lt.s32.totalorder %s26, 1
        %s372 = scalar_select %p371, %s26, 1
        %s373 = smul.addr %s372, 2
        %s374 = smul.addr %s373, 8
        %s375 = scalar_lea.vmem %s0, %s374
        %p376 = pneg %p47
        %p377 = pneg %p44
        %p378 = pneg %p68
        %p379 = pneg %p65
        %p380 = pneg %p89
        %p381 = pneg %p86
        %p382 = pneg %p110
        %p383 = pneg %p107
        %p384 = pneg %p131
        %p385 = pneg %p128
        %p386 = pneg %p152
        %p387 = pneg %p149
        %p388 = pneg %p173
        %p389 = pneg %p170
        %p390 = pneg %p194
        %p391 = pneg %p191
        %p392 = pneg %p215
        %p393 = pneg %p212
        %p394 = pneg %p236
        %p395 = pneg %p233
        %p396 = pneg %p257
        %p397 = pneg %p254
        %p398 = pneg %p278
        %p399 = pneg %p275
        %p400 = pneg %p304
        %p401 = pneg %p301
        %s402 = sand.u32 %s291, 1
        %s403 = scalar_lea.sflag [#allocation3], %s402
        %s404 = sand.u32 %s291, 1
        %s405 = smul.addr %s404, 16
        %s406 = scalar_lea.vmem [#allocation2], %s405
        %p407 = scmp.lt.s32.totalorder %s26, 1
        %s408 = scalar_select %p407, %s26, 1
        %s409 = smul.addr %s408, 2
        %s410 = smul.addr %s409, 8
        %s411 = scalar_lea.vmem %s0, %s410
        %v412 = vld [vmem:[%s411] sm:$0xff]
        %v413 = vld [vmem:[%s411 + $0x8] sm:$0xff]
        %v414 = vld [vmem:[%s1] sm:$0xff]
        %v415 = vld [vmem:[%s1 + $0x8] sm:$0xff]
        %v416 = vld [vmem:[%s2] sm:$0x7]
        %v417 = vld [vmem:[%s3] sm:$0x1]
        %v419 = vlaneseq
        %v420 = vshrl.u32 %v419, 7
        %v421 = vsub.s32 0, %v420
        %v422 = vrot.slane %v417, %v421
        %vm424 = vcmask 23552
        %v426 = vsel %vm424, %v412, 0
        %v429 = vsel %vm424, %v413, 0
        %vm431 = vcmask 1042432
        %v433 = vsel %vm431, %v416, 0
        %435 = vmatprep.subr.mxu0 0.0
        %436 = vmatpush1.msra.mxu0 %v433
        %437 = vmatprep.subr.mxu0 0.0
        %438 = vmatpush1.msra.mxu0 0.0
        %439 = vmatprep.subr.mxu0 0.0
        %440 = vmatpush1.msra.mxu0 0.0
        %441 = vmatprep.subr.mxu0 0.0
        %442 = vmatpush1.msra.mxu0 0.0
        %443 = vmatprep.subr.mxu0 0.0
        %444 = vmatpush1.msra.mxu0 0.0
        %445 = vmatprep.subr.mxu0 0.0
        %446 = vmatpush1.msra.mxu0 0.0
        %447 = vmatprep.subr.mxu0 0.0
        %448 = vmatpush1.msra.mxu0 0.0
        %449 = vmatprep.subr.mxu0 0.0
        %450 = vmatpush1.msra.mxu0 0.0
        %451 = vmatprep.subr.mxu0 0.0
        %452 = vmatpush1.msra.mxu0 0.0
        %453 = vmatprep.subr.mxu0 0.0
        %454 = vmatpush1.msra.mxu0 0.0
        %455 = vmatprep.subr.mxu0 0.0
        %456 = vmatpush1.msra.mxu0 0.0
        %457 = vmatprep.subr.mxu0 0.0
        %458 = vmatpush1.msra.mxu0 0.0
        %459 = vmatprep.subr.mxu0 0.0
        %460 = vmatpush1.msra.mxu0 0.0
        %461 = vmatprep.subr.mxu0 0.0
        %462 = vmatpush1.msra.mxu0 0.0
        %463 = vmatprep.subr.mxu0 0.0
        %464 = vmatpush1.msra.mxu0 0.0
        %465 = vmatprep.subr.mxu0 0.0
        %466 = vmatpush1.msra.mxu0 0.0
        %467 = vmatprep.subr.mxu0 0.0
        %468 = vmatpush1.msra.mxu0 0.0
        %469 = vmatprep.subr.mxu0 0.0
        %470 = vmatpush1.msra.mxu0 0.0
        %471 = vmatprep.subr.mxu0 0.0
        %472 = vmatpush1.msra.mxu0 0.0
        %473 = vmatprep.subr.mxu0 0.0
        %474 = vmatpush1.msra.mxu0 0.0
        %475 = vmatprep.subr.mxu0 0.0
        %476 = vmatpush1.msra.mxu0 0.0
        %477 = vmatprep.subr.mxu0 0.0
        %478 = vmatpush1.msra.mxu0 0.0
        %479 = vmatprep.subr.mxu0 0.0
        %480 = vmatpush1.msra.mxu0 0.0
        %481 = vmatprep.subr.mxu0 0.0
        %482 = vmatpush1.msra.mxu0 0.0
        %483 = vmatprep.subr.mxu0 0.0
        %484 = vmatpush1.msra.mxu0 0.0
        %485 = vmatprep.subr.mxu0 0.0
        %486 = vmatpush1.msra.mxu0 0.0
        %487 = vmatprep.subr.mxu0 0.0
        %488 = vmatpush1.msra.mxu0 0.0
        %489 = vmatprep.subr.mxu0 0.0
        %490 = vmatpush1.msra.mxu0 0.0
        %491 = vmatprep.subr.mxu0 0.0
        %492 = vmatpush1.msra.mxu0 0.0
        %493 = vmatprep.subr.mxu0 0.0
        %494 = vmatpush1.msra.mxu0 0.0
        %495 = vmatprep.subr.mxu0 0.0
        %496 = vmatpush1.msra.mxu0 0.0
        %497 = vmatprep.subr.mxu0 0.0
        %498 = vmatpush1.msra.mxu0 0.0
        %499 = vmatprep.mubr.f32.mxu0 0.0
        %500 = vmatmul.mubr.f32.gmra.mrb[0].mxu0 %v426
        %v501 = vpop.f32.mrb[0].mxu0
        %v502 = vadd.f32 %v422, %v501
        %v503 = vpop.f32.mrb[0].mxu0
        %504 = vmatprep.mubr.f32.mxu0 0.0
        %505 = vmatmul.mubr.f32.gmra.mrb[0].mxu0 %v429
        %v506 = vpop.f32.mrb[0].mxu0
        %v507 = vadd.f32 %v422, %v506
        %v508 = vpop.f32.mrb[0].mxu0
        %509 = vdwg.mxu0
        %vm510 = vcmp.gt.f32.partialorder %v502, 0.0
        %vm511 = vcmp.gt.f32.partialorder %v507, 0.0
        %v512 = vmin.f32 %v502, 0.0
        %v513 = vmin.f32 %v507, 0.0
        %v514 = vmul.f32 %v512, 1.442695
        %v515 = vpow.pop %v514
        %v516 = vmul.f32 %v513, 1.442695
        %v517 = vpow.pop %v516
        %v518 = vsub.f32 %v515, 1.0
        %v519 = vsub.f32 %v517, 1.0
        %v520 = vmul.f32 %v518, 1.6732632
        %v521 = vmul.f32 %v519, 1.6732632
        %v522 = vsel %vm510, %v502, %v520
        %v523 = vsel %vm511, %v507, %v521
        %v524 = vmul.f32 %v522, 1.050701
        %v525 = vmul.f32 %v523, 1.050701
        %vm526 = vcmask 261120
        %v527 = vsel %vm526, %v524, -inf
        %v528 = vsel %vm526, %v525, -inf
        %v529 = vmax.f32 %v527, %v528
        %v530 = vrot.slane %v529, 4
        %v531 = vmax.f32 %v529, %v530
        %v532 = vrot.slane %v531, 2
        %v533 = vmax.f32 %v531, %v532
        %v534 = vrot.slane %v533, 1
        %v535 = vmax.f32 %v533, %v534
        %v536 = vld [vmem:[%s4] sm:$0xff]
        %v537 = vld [vmem:[%s4 + $0x8] sm:$0xff]
        %v538 = vld [vmem:[%s4 + $0x10] sm:$0xff]
        %v539 = vld [vmem:[%s4 + $0x18] sm:$0xff]
        %v540 = vld [vmem:[%s5] sm:$0x1]
        %v542 = vsel %vm526, %v535, 0
        %544 = vmatprep.subr.mxu0 0.0
        %545 = vmatpush1.msra.mxu0 %v536
        %546 = vmatprep.subr.mxu0 0.0
        %547 = vmatpush1.msra.mxu0 %v537
        %548 = vmatprep.subr.mxu0 0.0
        %549 = vmatpush1.msra.mxu0 %v538
        %550 = vmatprep.subr.mxu0 0.0
        %551 = vmatpush1.msra.mxu0 %v539
        %552 = vmatprep.subr.mxu0 0.0
        %553 = vmatpush1.msra.mxu0 0.0
        %554 = vmatprep.subr.mxu0 0.0
        %555 = vmatpush1.msra.mxu0 0.0
        %556 = vmatprep.subr.mxu0 0.0
        %557 = vmatpush1.msra.mxu0 0.0
        %558 = vmatprep.subr.mxu0 0.0
        %559 = vmatpush1.msra.mxu0 0.0
        %560 = vmatprep.subr.mxu0 0.0
        %561 = vmatpush1.msra.mxu0 0.0
        %562 = vmatprep.subr.mxu0 0.0
        %563 = vmatpush1.msra.mxu0 0.0
        %564 = vmatprep.subr.mxu0 0.0
        %565 = vmatpush1.msra.mxu0 0.0
        %566 = vmatprep.subr.mxu0 0.0
        %567 = vmatpush1.msra.mxu0 0.0
        %568 = vmatprep.subr.mxu0 0.0
        %569 = vmatpush1.msra.mxu0 0.0
        %570 = vmatprep.subr.mxu0 0.0
        %571 = vmatpush1.msra.mxu0 0.0
        %572 = vmatprep.subr.mxu0 0.0
        %573 = vmatpush1.msra.mxu0 0.0
        %574 = vmatprep.subr.mxu0 0.0
        %575 = vmatpush1.msra.mxu0 0.0
        %576 = vmatprep.subr.mxu0 0.0
        %577 = vmatpush1.msra.mxu0 0.0
        %578 = vmatprep.subr.mxu0 0.0
        %579 = vmatpush1.msra.mxu0 0.0
        %580 = vmatprep.subr.mxu0 0.0
        %581 = vmatpush1.msra.mxu0 0.0
        %582 = vmatprep.subr.mxu0 0.0
        %583 = vmatpush1.msra.mxu0 0.0
        %584 = vmatprep.subr.mxu0 0.0
        %585 = vmatpush1.msra.mxu0 0.0
        %586 = vmatprep.subr.mxu0 0.0
        %587 = vmatpush1.msra.mxu0 0.0
        %588 = vmatprep.subr.mxu0 0.0
        %589 = vmatpush1.msra.mxu0 0.0
        %590 = vmatprep.subr.mxu0 0.0
        %591 = vmatpush1.msra.mxu0 0.0
        %592 = vmatprep.subr.mxu0 0.0
        %593 = vmatpush1.msra.mxu0 0.0
        %594 = vmatprep.subr.mxu0 0.0
        %595 = vmatpush1.msra.mxu0 0.0
        %596 = vmatprep.subr.mxu0 0.0
        %597 = vmatpush1.msra.mxu0 0.0
        %598 = vmatprep.subr.mxu0 0.0
        %599 = vmatpush1.msra.mxu0 0.0
        %600 = vmatprep.subr.mxu0 0.0
        %601 = vmatpush1.msra.mxu0 0.0
        %602 = vmatprep.subr.mxu0 0.0
        %603 = vmatpush1.msra.mxu0 0.0
        %604 = vmatprep.subr.mxu0 0.0
        %605 = vmatpush1.msra.mxu0 0.0
        %606 = vmatprep.subr.mxu0 0.0
        %607 = vmatpush1.msra.mxu0 0.0
        %608 = vmatprep.mubr.f32.mxu0 0.0
        %609 = vmatmul.mubr.f32.gmra.mrb[0].mxu0 %v542
        %v610 = vpop.f32.mrb[0].mxu0
        %v611 = vadd.f32 %v540, %v610
        %v612 = vpop.f32.mrb[0].mxu0
        %613 = vdwg.mxu0
        %vm614 = vcmp.gt.f32.partialorder %v611, 0.0
        %v615 = vmin.f32 %v611, 0.0
        %v616 = vmul.f32 %v615, 1.442695
        %v617 = vpow.pop %v616
        %v618 = vsub.f32 %v617, 1.0
        %v619 = vmul.f32 %v618, 1.6732632
        %v620 = vsel %vm614, %v611, %v619
        %v621 = vmul.f32 %v620, 1.050701
        %v622 = vld [vmem:[%s6] sm:$0xff]
        %v623 = vld [vmem:[%s6 + $0x8] sm:$0xff]
        %v624 = vld [vmem:[%s6 + $0x10] sm:$0xff]
        %v625 = vld [vmem:[%s6 + $0x18] sm:$0xff]
        %v627 = vsel %vm526, %v621, 0
        %629 = vmatprep.subr.mxu0 0.0
        %630 = vmatpush1.msra.mxu0 %v622
        %631 = vmatprep.subr.mxu0 0.0
        %632 = vmatpush1.msra.mxu0 %v623
        %633 = vmatprep.subr.mxu0 0.0
        %634 = vmatpush1.msra.mxu0 %v624
        %635 = vmatprep.subr.mxu0 0.0
        %636 = vmatpush1.msra.mxu0 %v625
        %637 = vmatprep.subr.mxu0 0.0
        %638 = vmatpush1.msra.mxu0 0.0
        %639 = vmatprep.subr.mxu0 0.0
        %640 = vmatpush1.msra.mxu0 0.0
        %641 = vmatprep.subr.mxu0 0.0
        %642 = vmatpush1.msra.mxu0 0.0
        %643 = vmatprep.subr.mxu0 0.0
        %644 = vmatpush1.msra.mxu0 0.0
        %645 = vmatprep.subr.mxu0 0.0
        %646 = vmatpush1.msra.mxu0 0.0
        %647 = vmatprep.subr.mxu0 0.0
        %648 = vmatpush1.msra.mxu0 0.0
        %649 = vmatprep.subr.mxu0 0.0
        %650 = vmatpush1.msra.mxu0 0.0
        %651 = vmatprep.subr.mxu0 0.0
        %652 = vmatpush1.msra.mxu0 0.0
        %653 = vmatprep.subr.mxu0 0.0
        %654 = vmatpush1.msra.mxu0 0.0
        %655 = vmatprep.subr.mxu0 0.0
        %656 = vmatpush1.msra.mxu0 0.0
        %657 = vmatprep.subr.mxu0 0.0
        %658 = vmatpush1.msra.mxu0 0.0
        %659 = vmatprep.subr.mxu0 0.0
        %660 = vmatpush1.msra.mxu0 0.0
        %661 = vmatprep.subr.mxu0 0.0
        %662 = vmatpush1.msra.mxu0 0.0
        %663 = vmatprep.subr.mxu0 0.0
        %664 = vmatpush1.msra.mxu0 0.0
        %665 = vmatprep.subr.mxu0 0.0
        %666 = vmatpush1.msra.mxu0 0.0
        %667 = vmatprep.subr.mxu0 0.0
        %668 = vmatpush1.msra.mxu0 0.0
        %669 = vmatprep.subr.mxu0 0.0
        %670 = vmatpush1.msra.mxu0 0.0
        %671 = vmatprep.subr.mxu0 0.0
        %672 = vmatpush1.msra.mxu0 0.0
        %673 = vmatprep.subr.mxu0 0.0
        %674 = vmatpush1.msra.mxu0 0.0
        %675 = vmatprep.subr.mxu0 0.0
        %676 = vmatpush1.msra.mxu0 0.0
        %677 = vmatprep.subr.mxu0 0.0
        %678 = vmatpush1.msra.mxu0 0.0
        %679 = vmatprep.subr.mxu0 0.0
        %680 = vmatpush1.msra.mxu0 0.0
        %681 = vmatprep.subr.mxu0 0.0
        %682 = vmatpush1.msra.mxu0 0.0
        %683 = vmatprep.subr.mxu0 0.0
        %684 = vmatpush1.msra.mxu0 0.0
        %685 = vmatprep.subr.mxu0 0.0
        %686 = vmatpush1.msra.mxu0 0.0
        %687 = vmatprep.subr.mxu0 0.0
        %688 = vmatpush1.msra.mxu0 0.0
        %689 = vmatprep.subr.mxu0 0.0
        %690 = vmatpush1.msra.mxu0 0.0
        %691 = vmatprep.subr.mxu0 0.0
        %692 = vmatpush1.msra.mxu0 0.0
        %693 = vmatprep.mubr.f32.mxu0 0.0
        %694 = vmatmul.mubr.f32.gmra.mrb[0].mxu0 %v627
        %v695 = vpop.f32.mrb[0].mxu0
        %v696 = vadd.f32 0.0, %v695
        %v697 = vpop.f32.mrb[0].mxu0
        %698 = vdwg.mxu0
        %v699 = vld [vmem:[%s7] sm:$0x3]
        %v700 = vlaneseq
        %v701 = vshrl.u32 %v700, 7
        %v702 = vsub.s32 0, %v701
        %v703 = vrot.slane %v696, %v702
        %vm704 = vcmask 15360
        %v706 = vsel %vm704, %v414, 0
        %v709 = vsel %vm704, %v415, 0
        %vm711 = vcmask 1041408
        %v713 = vsel %vm711, %v699, 0
        %715 = vmatprep.subr.mxu0 0.0
        %716 = vmatpush1.msra.mxu0 %v713
        %717 = vmatprep.subr.mxu0 0.0
        %718 = vmatpush1.msra.mxu0 0.0
        %719 = vmatprep.subr.mxu0 0.0
        %720 = vmatpush1.msra.mxu0 0.0
        %721 = vmatprep.subr.mxu0 0.0
        %722 = vmatpush1.msra.mxu0 0.0
        %723 = vmatprep.subr.mxu0 0.0
        %724 = vmatpush1.msra.mxu0 0.0
        %725 = vmatprep.subr.mxu0 0.0
        %726 = vmatpush1.msra.mxu0 0.0
        %727 = vmatprep.subr.mxu0 0.0
        %728 = vmatpush1.msra.mxu0 0.0
        %729 = vmatprep.subr.mxu0 0.0
        %730 = vmatpush1.msra.mxu0 0.0
        %731 = vmatprep.subr.mxu0 0.0
        %732 = vmatpush1.msra.mxu0 0.0
        %733 = vmatprep.subr.mxu0 0.0
        %734 = vmatpush1.msra.mxu0 0.0
        %735 = vmatprep.subr.mxu0 0.0
        %736 = vmatpush1.msra.mxu0 0.0
        %737 = vmatprep.subr.mxu0 0.0
        %738 = vmatpush1.msra.mxu0 0.0
        %739 = vmatprep.subr.mxu0 0.0
        %740 = vmatpush1.msra.mxu0 0.0
        %741 = vmatprep.subr.mxu0 0.0
        %742 = vmatpush1.msra.mxu0 0.0
        %743 = vmatprep.subr.mxu0 0.0
        %744 = vmatpush1.msra.mxu0 0.0
        %745 = vmatprep.subr.mxu0 0.0
        %746 = vmatpush1.msra.mxu0 0.0
        %747 = vmatprep.subr.mxu0 0.0
        %748 = vmatpush1.msra.mxu0 0.0
        %749 = vmatprep.subr.mxu0 0.0
        %750 = vmatpush1.msra.mxu0 0.0
        %751 = vmatprep.subr.mxu0 0.0
        %752 = vmatpush1.msra.mxu0 0.0
        %753 = vmatprep.subr.mxu0 0.0
        %754 = vmatpush1.msra.mxu0 0.0
        %755 = vmatprep.subr.mxu0 0.0
        %756 = vmatpush1.msra.mxu0 0.0
        %757 = vmatprep.subr.mxu0 0.0
        %758 = vmatpush1.msra.mxu0 0.0
        %759 = vmatprep.subr.mxu0 0.0
        %760 = vmatpush1.msra.mxu0 0.0
        %761 = vmatprep.subr.mxu0 0.0
        %762 = vmatpush1.msra.mxu0 0.0
        %763 = vmatprep.subr.mxu0 0.0
        %764 = vmatpush1.msra.mxu0 0.0
        %765 = vmatprep.subr.mxu0 0.0
        %766 = vmatpush1.msra.mxu0 0.0
        %767 = vmatprep.subr.mxu0 0.0
        %768 = vmatpush1.msra.mxu0 0.0
        %769 = vmatprep.subr.mxu0 0.0
        %770 = vmatpush1.msra.mxu0 0.0
        %771 = vmatprep.subr.mxu0 0.0
        %772 = vmatpush1.msra.mxu0 0.0
        %773 = vmatprep.subr.mxu0 0.0
        %774 = vmatpush1.msra.mxu0 0.0
        %775 = vmatprep.subr.mxu0 0.0
        %776 = vmatpush1.msra.mxu0 0.0
        %777 = vmatprep.subr.mxu0 0.0
        %778 = vmatpush1.msra.mxu0 0.0
        %779 = vmatprep.mubr.f32.mxu0 0.0
        %780 = vmatmul.mubr.f32.gmra.mrb[0].mxu0 %v706
        %v781 = vpop.f32.mrb[0].mxu0
        %v782 = vadd.f32 %v703, %v781
        %v783 = vpop.f32.mrb[0].mxu0
        %784 = vmatprep.mubr.f32.mxu0 0.0
        %785 = vmatmul.mubr.f32.gmra.mrb[0].mxu0 %v709
        %v786 = vpop.f32.mrb[0].mxu0
        %v787 = vadd.f32 %v703, %v786
        %v788 = vpop.f32.mrb[0].mxu0
        %789 = vdwg.mxu0
        %v790 = vld [vmem:[%s8] sm:$0x1]
        %v792 = vlaneseq
        %v793 = vshrl.u32 %v792, 7
        %v794 = vsub.s32 0, %v793
        %v795 = vrot.slane %v790, %v794
        %v797 = vadd.f32 %v782, %v795
        %v798 = vadd.f32 %v787, %v795
        %vm799 = vcmp.gt.f32.partialorder %v797, 0.0
        %vm800 = vcmp.gt.f32.partialorder %v798, 0.0
        %v801 = vmin.f32 %v797, 0.0
        %v802 = vmin.f32 %v798, 0.0
        %v803 = vmul.f32 %v801, 1.442695
        %v804 = vpow.pop %v803
        %v805 = vmul.f32 %v802, 1.442695
        %v806 = vpow.pop %v805
        %v807 = vsub.f32 %v804, 1.0
        %v808 = vsub.f32 %v806, 1.0
        %v809 = vmul.f32 %v807, 1.6732632
        %v810 = vmul.f32 %v808, 1.6732632
        %v811 = vsel %vm799, %v797, %v809
        %v812 = vsel %vm800, %v798, %v810
        %v813 = vmul.f32 %v811, 1.050701
        %v814 = vmul.f32 %v812, 1.050701
        %v815 = vld [vmem:[%s9] sm:$0xff]
        %v816 = vld [vmem:[%s9 + $0x8] sm:$0xff]
        %v817 = vld [vmem:[%s9 + $0x10] sm:$0xff]
        %v818 = vld [vmem:[%s9 + $0x18] sm:$0xff]
        %819 = vmatprep.subr.mxu0 0.0
        %820 = vmatpush1.msra.mxu0 %v815
        %821 = vmatprep.subr.mxu0 0.0
        %822 = vmatpush1.msra.mxu0 %v816
        %823 = vmatprep.subr.mxu0 0.0
        %824 = vmatpush1.msra.mxu0 %v817
        %825 = vmatprep.subr.mxu0 0.0
        %826 = vmatpush1.msra.mxu0 %v818
        %827 = vmatprep.subr.mxu0 0.0
        %828 = vmatpush1.msra.mxu0 0.0
        %829 = vmatprep.subr.mxu0 0.0
        %830 = vmatpush1.msra.mxu0 0.0
        %831 = vmatprep.subr.mxu0 0.0
        %832 = vmatpush1.msra.mxu0 0.0
        %833 = vmatprep.subr.mxu0 0.0
        %834 = vmatpush1.msra.mxu0 0.0
        %835 = vmatprep.subr.mxu0 0.0
        %836 = vmatpush1.msra.mxu0 0.0
        %837 = vmatprep.subr.mxu0 0.0
        %838 = vmatpush1.msra.mxu0 0.0
        %839 = vmatprep.subr.mxu0 0.0
        %840 = vmatpush1.msra.mxu0 0.0
        %841 = vmatprep.subr.mxu0 0.0
        %842 = vmatpush1.msra.mxu0 0.0
        %843 = vmatprep.subr.mxu0 0.0
        %844 = vmatpush1.msra.mxu0 0.0
        %845 = vmatprep.subr.mxu0 0.0
        %846 = vmatpush1.msra.mxu0 0.0
        %847 = vmatprep.subr.mxu0 0.0
        %848 = vmatpush1.msra.mxu0 0.0
        %849 = vmatprep.subr.mxu0 0.0
        %850 = vmatpush1.msra.mxu0 0.0
        %851 = vmatprep.subr.mxu0 0.0
        %852 = vmatpush1.msra.mxu0 0.0
        %853 = vmatprep.subr.mxu0 0.0
        %854 = vmatpush1.msra.mxu0 0.0
        %855 = vmatprep.subr.mxu0 0.0
        %856 = vmatpush1.msra.mxu0 0.0
        %857 = vmatprep.subr.mxu0 0.0
        %858 = vmatpush1.msra.mxu0 0.0
        %859 = vmatprep.subr.mxu0 0.0
        %860 = vmatpush1.msra.mxu0 0.0
        %861 = vmatprep.subr.mxu0 0.0
        %862 = vmatpush1.msra.mxu0 0.0
        %863 = vmatprep.subr.mxu0 0.0
        %864 = vmatpush1.msra.mxu0 0.0
        %865 = vmatprep.subr.mxu0 0.0
        %866 = vmatpush1.msra.mxu0 0.0
        %867 = vmatprep.subr.mxu0 0.0
        %868 = vmatpush1.msra.mxu0 0.0
        %869 = vmatprep.subr.mxu0 0.0
        %870 = vmatpush1.msra.mxu0 0.0
        %871 = vmatprep.subr.mxu0 0.0
        %872 = vmatpush1.msra.mxu0 0.0
        %873 = vmatprep.subr.mxu0 0.0
        %874 = vmatpush1.msra.mxu0 0.0
        %875 = vmatprep.subr.mxu0 0.0
        %876 = vmatpush1.msra.mxu0 0.0
        %877 = vmatprep.subr.mxu0 0.0
        %878 = vmatpush1.msra.mxu0 0.0
        %879 = vmatprep.subr.mxu0 0.0
        %880 = vmatpush1.msra.mxu0 0.0
        %881 = vmatprep.subr.mxu0 0.0
        %882 = vmatpush1.msra.mxu0 0.0
        %883 = vmatprep.mubr.f32.mxu0 0.0
        %884 = vmatmul.mubr.f32.gmra.mrb[0].mxu0 %v627
        %v885 = vpop.f32.mrb[0].mxu0
        %v886 = vadd.f32 0.0, %v885
        %v887 = vpop.f32.mrb[0].mxu0
        %888 = vdwg.mxu0
        %v889 = vld [vmem:[%s10] sm:$0x7]
        %v890 = vlaneseq
        %v891 = vshrl.u32 %v890, 7
        %v892 = vsub.s32 0, %v891
        %v893 = vrot.slane %v886, %v892
        %v895 = vsel %vm424, %v813, 0
        %v898 = vsel %vm424, %v814, 0
        %v901 = vsel %vm431, %v889, 0
        %903 = vmatprep.subr.mxu0 0.0
        %904 = vmatpush1.msra.mxu0 %v901
        %905 = vmatprep.subr.mxu0 0.0
        %906 = vmatpush1.msra.mxu0 0.0
        %907 = vmatprep.subr.mxu0 0.0
        %908 = vmatpush1.msra.mxu0 0.0
        %909 = vmatprep.subr.mxu0 0.0
        %910 = vmatpush1.msra.mxu0 0.0
        %911 = vmatprep.subr.mxu0 0.0
        %912 = vmatpush1.msra.mxu0 0.0
        %913 = vmatprep.subr.mxu0 0.0
        %914 = vmatpush1.msra.mxu0 0.0
        %915 = vmatprep.subr.mxu0 0.0
        %916 = vmatpush1.msra.mxu0 0.0
        %917 = vmatprep.subr.mxu0 0.0
        %918 = vmatpush1.msra.mxu0 0.0
        %919 = vmatprep.subr.mxu0 0.0
        %920 = vmatpush1.msra.mxu0 0.0
        %921 = vmatprep.subr.mxu0 0.0
        %922 = vmatpush1.msra.mxu0 0.0
        %923 = vmatprep.subr.mxu0 0.0
        %924 = vmatpush1.msra.mxu0 0.0
        %925 = vmatprep.subr.mxu0 0.0
        %926 = vmatpush1.msra.mxu0 0.0
        %927 = vmatprep.subr.mxu0 0.0
        %928 = vmatpush1.msra.mxu0 0.0
        %929 = vmatprep.subr.mxu0 0.0
        %930 = vmatpush1.msra.mxu0 0.0
        %931 = vmatprep.subr.mxu0 0.0
        %932 = vmatpush1.msra.mxu0 0.0
        %933 = vmatprep.subr.mxu0 0.0
        %934 = vmatpush1.msra.mxu0 0.0
        %935 = vmatprep.subr.mxu0 0.0
        %936 = vmatpush1.msra.mxu0 0.0
        %937 = vmatprep.subr.mxu0 0.0
        %938 = vmatpush1.msra.mxu0 0.0
        %939 = vmatprep.subr.mxu0 0.0
        %940 = vmatpush1.msra.mxu0 0.0
        %941 = vmatprep.subr.mxu0 0.0
        %942 = vmatpush1.msra.mxu0 0.0
        %943 = vmatprep.subr.mxu0 0.0
        %944 = vmatpush1.msra.mxu0 0.0
        %945 = vmatprep.subr.mxu0 0.0
        %946 = vmatpush1.msra.mxu0 0.0
        %947 = vmatprep.subr.mxu0 0.0
        %948 = vmatpush1.msra.mxu0 0.0
        %949 = vmatprep.subr.mxu0 0.0
        %950 = vmatpush1.msra.mxu0 0.0
        %951 = vmatprep.subr.mxu0 0.0
        %952 = vmatpush1.msra.mxu0 0.0
        %953 = vmatprep.subr.mxu0 0.0
        %954 = vmatpush1.msra.mxu0 0.0
        %955 = vmatprep.subr.mxu0 0.0
        %956 = vmatpush1.msra.mxu0 0.0
        %957 = vmatprep.subr.mxu0 0.0
        %958 = vmatpush1.msra.mxu0 0.0
        %959 = vmatprep.subr.mxu0 0.0
        %960 = vmatpush1.msra.mxu0 0.0
        %961 = vmatprep.subr.mxu0 0.0
        %962 = vmatpush1.msra.mxu0 0.0
        %963 = vmatprep.subr.mxu0 0.0
        %964 = vmatpush1.msra.mxu0 0.0
        %965 = vmatprep.subr.mxu0 0.0
        %966 = vmatpush1.msra.mxu0 0.0
        %967 = vmatprep.mubr.f32.mxu0 0.0
        %968 = vmatmul.mubr.f32.gmra.mrb[0].mxu0 %v895
        %v969 = vpop.f32.mrb[0].mxu0
        %v970 = vadd.f32 %v893, %v969
        %v971 = vpop.f32.mrb[0].mxu0
        %972 = vmatprep.mubr.f32.mxu0 0.0
        %973 = vmatmul.mubr.f32.gmra.mrb[0].mxu0 %v898
        %v974 = vpop.f32.mrb[0].mxu0
        %v975 = vadd.f32 %v893, %v974
        %v976 = vpop.f32.mrb[0].mxu0
        %977 = vdwg.mxu0
        %v978 = vld [vmem:[%s11] sm:$0x1]
        %v980 = vlaneseq
        %v981 = vshrl.u32 %v980, 7
        %v982 = vsub.s32 0, %v981
        %v983 = vrot.slane %v978, %v982
        %v985 = vadd.f32 %v970, %v983
        %v986 = vadd.f32 %v975, %v983
        %vm987 = vcmp.gt.f32.partialorder %v985, 0.0
        %vm988 = vcmp.gt.f32.partialorder %v986, 0.0
        %v989 = vmin.f32 %v985, 0.0
        %v990 = vmin.f32 %v986, 0.0
        %v991 = vmul.f32 %v989, 1.442695
        %v992 = vpow.pop %v991
        %v993 = vmul.f32 %v990, 1.442695
        %v994 = vpow.pop %v993
        %v995 = vsub.f32 %v992, 1.0
        %v996 = vsub.f32 %v994, 1.0
        %v997 = vmul.f32 %v995, 1.6732632
        %v998 = vmul.f32 %v996, 1.6732632
        %v999 = vsel %vm987, %v985, %v997
        %v1000 = vsel %vm988, %v986, %v998
        %v1001 = vmul.f32 %v999, 1.050701
        %v1002 = vmul.f32 %v1000, 1.050701
        %1003 = vst [vmem:[%s406] sm:$0xff] %v1001
        %1004 = vst [vmem:[%s406 + $0x8] sm:$0xff] %v1002
        %s1005 = sand.u32 %s291, 1
        %s1006 = scalar_lea.sflag [#allocation3], %s1005
        %s1007 = sand.u32 %s291, 1
        %s1008 = smul.addr %s1007, 16
        %s1009 = scalar_lea.vmem [#allocation2], %s1008
        // Predicated region
        $region69: #{tpu_custom_call.1} parent=67 // pred_check
          %p1010 = pneg %p301
        $region70: #{tpu_custom_call.1} parent=67 // pred_check_branch
          %1012 = sbr.rel (%p1010) target = $region72
        $region71: #{tpu_custom_call.1} parent=67 // pred_region
          %s1014 = ssub.s32 256, 256
          %1015 = vsyncadd %s1006, %s1014
          %s1016 = smul.addr %s26, 2
          %s1017 = smul.addr %s1016, 128
          %s1018 = scalar_lea.hbm %s12, %s1017
          %s1019 = sshll.u32 %s1009, 4
          %s1020 = int_to_ptr.vmem [resolvable:$true] %s1019
          %1025 = dma.vmem_to_hbm [thread:$0]  %s1020, 256, %s1018, %s1006, 128, 128, 8
        $region72: #{tpu_custom_call.1} parent=67 // pred_fallthru
          _
      $region68: #{tpu_custom_call.1} parent=5 // pred_fallthru
        _
      %p1026 = scmp.le.s32.totalorder 2, %s21
      // Predicated region
      $region73: #{tpu_custom_call.1} parent=5 // pred_check
        %p1027 = pneg %p1026
      $region74: #{tpu_custom_call.1} parent=5 // pred_check_branch
        %1029 = sbr.rel (%p1027) target = $region76
      $region75: #{tpu_custom_call.1} parent=5 // pred_region
        %s1030 = ssub.s32 %s21, 2
        // Predicated region
        $region77: #{tpu_custom_call.1} parent=75 // pred_check
          %p1031 = pneg %p307
        $region78: #{tpu_custom_call.1} parent=75 // pred_check_branch
          %1033 = sbr.rel (%p1031) target = $region80
        $region79: #{tpu_custom_call.1} parent=75 // pred_region
          %s1034 = sand.u32 %s292, 1
          %s1035 = scalar_lea.sflag [#allocation3], %s1034
          %s1036 = sand.u32 %s292, 1
          %s1037 = smul.addr %s1036, 16
          %s1038 = scalar_lea.vmem [#allocation2], %s1037
          %1039 = dma.done %s1035, 256
        $region80: #{tpu_custom_call.1} parent=75 // pred_fallthru
          _
      $region76: #{tpu_custom_call.1} parent=5 // pred_fallthru
        _
    $region6: #{tpu_custom_call.1} parent=1 // loop_footer
      %s25 = sadd.s32 1, %s21
    $region7: #{tpu_custom_call.1} parent=1 // loop_footer_branch
      %20 = sbr.rel target = $region3
    $region8: #{tpu_custom_call.1} parent=1 // loop_exit
      _
    %1040 = vsyncpa [#allocation3], 1
    %s1041 = scalar_lea.sflag [#allocation3], 1
    %1042 = vsyncpa %s1041, 1

</llo_original>
